<compile_context>
chip_gen: v5e
topology: v5e:2x2
jax: 0.10.0
libtpu: 0.0.40
codegen_flags: <defaults>
</compile_context>

<pallas_src>
import functools

import jax
import jax.numpy as jnp
from jax.experimental import pallas as pl
from jax.experimental.pallas import tpu as pltpu

PACK = 8  # batch rows packed per 128-lane row


def reward_mlp_kernel(s_ref, ns_ref,
                      w1s_ref, w1n_ref, b1_ref,
                      w2_ref, b2_ref,
                      w3_ref, b3_ref,
                      out_ref):
    # Cast streamed f32 activations to the weights' compute dtype in-kernel
    # (avoids a separate HBM materialization pass in the wrapper).
    s = s_ref[...].astype(w1s_ref.dtype)
    ns = ns_ref[...].astype(w1n_ref.dtype)

    # Layer 1: two block-diagonal dots accumulate == cat((s, ns), dim=1) @ W1.
    h = (jnp.dot(s, w1s_ref[...], preferred_element_type=jnp.float32)
         + jnp.dot(ns, w1n_ref[...], preferred_element_type=jnp.float32)
         + b1_ref[...])
    h = jnp.maximum(h, 0.0)

    # Layer 2: Linear -> ReLU (bf16 operands, f32 accumulation).
    h = (jnp.dot(h.astype(w2_ref.dtype), w2_ref[...],
                 preferred_element_type=jnp.float32) + b2_ref[...])
    h = jnp.maximum(h, 0.0)

    # Layer 3: final Linear, packed output (tr, PACK * n_rewards).
    out_ref[...] = (jnp.dot(h.astype(w3_ref.dtype), w3_ref[...],
                            preferred_element_type=jnp.float32)
                    + b3_ref[...]).astype(out_ref.dtype)


def _block_diag(w, pack):
    """kron(I_pack, w): packed-row version of per-row x @ w."""
    return jnp.kron(jnp.eye(pack, dtype=jnp.float32), w.astype(jnp.float32))


def reward_model(state, next_state, params, *, block_b=32768,
                 compute_dtype=jnp.bfloat16):
    """Predict reward from (state, next_state) with a batch-tiled Pallas kernel.

    Weights are stored transposed as (in_features, out_features); the kernel
    computes y = x @ W + b (== PyTorch x @ W.T + b with W (out, in)).
    """
    w1, b1, w2, b2, w3, b3 = params
    B, state_dim = state.shape
    n_hidden = w1.shape[1]
    n_rewards = w3.shape[1]

    # ---- lane packing: 8 batch rows per 128-lane row --------------------
    Bp = ((B + PACK - 1) // PACK) * PACK
    if Bp != B:
        pad = Bp - B
        state = jnp.pad(state, ((0, pad), (0, 0)))
        next_state = jnp.pad(next_state, ((0, pad), (0, 0)))
    R = Bp // PACK                           # packed rows
    lane_in = PACK * state_dim               # 128 for state_dim=16
    lane_out = PACK * n_rewards

    # Stream f32 activations (cast to bf16 happens inside the kernel).
    s_p = state.astype(jnp.float32).reshape(R, lane_in)
    ns_p = next_state.astype(jnp.float32).reshape(R, lane_in)

    # Block-diagonal weights (built once; resident in VMEM during the kernel).
    w1s_p = _block_diag(w1[:state_dim], PACK).astype(compute_dtype)
    w1n_p = _block_diag(w1[state_dim:], PACK).astype(compute_dtype)
    w2_p = _block_diag(w2, PACK).astype(compute_dtype)
    w3_p = _block_diag(w3, PACK).astype(compute_dtype)
    # Biases stay f32 (added after the f32-accumulated matmul).
    b1_p = jnp.tile(b1.astype(jnp.float32), (1, PACK))
    b2_p = jnp.tile(b2.astype(jnp.float32), (1, PACK))
    b3_p = jnp.tile(b3.astype(jnp.float32), (1, PACK))

    # ---- tile sizing ------------------------------------------------------
    tr = min(max(block_b // PACK, 8), R)
    # Give v7x's two TensorCores at least 2 tiles when the batch allows
    # (no-op on single-TC v5e/v6e; one extra grid step is negligible).
    if R >= 16:
        tr = min(tr, -(-R // 2))
    # Clamp to a conservative double-buffered VMEM budget (safe on v7x 64 MiB).
    per_row_bytes = (2 * lane_in * 4 + lane_out * 4) * 2
    budget = 40 << 20
    tr = min(tr, max(8, (budget // per_row_bytes) // 8 * 8))
    if R >= 8:
        tr = max(8, (tr // 8) * 8)           # f32 sublane tile is (8, 128)
    else:
        tr = R
    grid = (pl.cdiv(R, tr),)

    def act_spec():                          # streamed per-tile activations
        return pl.BlockSpec((tr, lane_in), lambda i: (i, 0))

    def const_spec(arr):                     # weights/biases: VMEM-resident
        return pl.BlockSpec(arr.shape, lambda i: (0, 0))

    wgt_bytes = sum(int(a.size) * a.dtype.itemsize
                    for a in (w1s_p, w1n_p, w2_p, w3_p, b1_p, b2_p, b3_p))
    act_bytes = 2 * (tr * lane_in * 4) * 2   # two inputs, double-buffered
    out_bytes = (tr * lane_out * 4) * 2
    vmem_limit = int(min(max(act_bytes + out_bytes + wgt_bytes + (4 << 20),
                             16 << 20), 48 << 20))

    cost = pl.CostEstimate(
        flops=2 * B * (2 * state_dim * n_hidden
                       + n_hidden * n_hidden
                       + n_hidden * n_rewards),
        transcendentals=0,
        bytes_accessed=2 * B * state_dim * 4 + B * n_rewards * 4 + wgt_bytes,
    )

    out_packed = pl.pallas_call(
        reward_mlp_kernel,
        out_shape=jax.ShapeDtypeStruct((R, lane_out), jnp.float32),
        grid=grid,
        in_specs=[
            act_spec(),                      # state   (packed)
            act_spec(),                      # next_state (packed)
            const_spec(w1s_p), const_spec(w1n_p), const_spec(b1_p),
            const_spec(w2_p), const_spec(b2_p),
            const_spec(w3_p), const_spec(b3_p),
        ],
        out_specs=pl.BlockSpec((tr, lane_out), lambda i: (i, 0)),
        compiler_params=pltpu.CompilerParams(
            dimension_semantics=("parallel",),   # v7x: shard tiles across 2 TCs
            vmem_limit_bytes=vmem_limit),
        cost_estimate=cost,
    )(s_p, ns_p, w1s_p, w1n_p, b1_p, w2_p, b2_p, w3_p, b3_p)

    # Unpack (R, PACK*n_rewards) -> (Bp, n_rewards) and drop padding rows.
    return out_packed.reshape(Bp, n_rewards)[:B]


def init_reward_net_params(key, state_dim, n_rewards=1, n_hidden=16):
    """Deterministic synthetic init matching nn.Linear shapes (transposed)."""
    k1, k2, k3, k4, k5, k6 = jax.random.split(key, 6)
    in_dim = state_dim * 2

    def lin(kw, kb, fan_in, fan_out):
        bound = 1.0 / jnp.sqrt(fan_in)
        w = jax.random.uniform(kw, (fan_in, fan_out), jnp.float32, -bound, bound)
        b = jax.random.uniform(kb, (1, fan_out), jnp.float32, -bound, bound)
        return w, b

    w1, b1 = lin(k1, k2, in_dim, n_hidden)
    w2, b2 = lin(k3, k4, n_hidden, n_hidden)
    w3, b3 = lin(k5, k6, n_hidden, n_rewards)
    return (w1, b1, w2, b2, w3, b3)


if __name__ == "__main__":
    key = jax.random.PRNGKey(0)
    k_params, k_s, k_ns = jax.random.split(key, 3)

    batch = 256          # small demo; forced >=2 tiles -> exercises the pipeline
    state_dim = 16
    n_hidden = 16
    n_rewards = 1

    params = init_reward_net_params(k_params, state_dim, n_rewards, n_hidden)
    state = jax.random.normal(k_s, (batch, state_dim), jnp.float32)
    next_state = jax.random.normal(k_ns, (batch, state_dim), jnp.float32)

    out = reward_model(state, next_state, params)
    jax.block_until_ready(out)
    assert out.shape == (batch, n_rewards)

    w1, b1, w2, b2, w3, b3 = params

    # Reference 1: mirror the kernel's bf16-operand / f32-accumulate math.
    bf16 = jnp.bfloat16
    s_b, ns_b = state.astype(bf16), next_state.astype(bf16)
    h = (jnp.dot(s_b, w1[:state_dim].astype(bf16), preferred_element_type=jnp.float32)
         + jnp.dot(ns_b, w1[state_dim:].astype(bf16), preferred_element_type=jnp.float32)
         + b1)
    h = jnp.maximum(h, 0.0)
    h = jnp.dot(h.astype(bf16), w2.astype(bf16),
                preferred_element_type=jnp.float32) + b2
    h = jnp.maximum(h, 0.0)
    ref_bf16 = jnp.dot(h.astype(bf16), w3.astype(bf16),
                       preferred_element_type=jnp.float32) + b3
    assert jnp.allclose(out, ref_bf16, atol=5e-3, rtol=5e-3)

    # Reference 2: original full-f32 MLP semantics (looser tol for bf16 cast).
    x = jnp.concatenate([state, next_state], axis=1)
    ref_f32 = jnp.maximum(x @ w1 + b1, 0.0)
    ref_f32 = jnp.maximum(ref_f32 @ w2 + b2, 0.0)
    ref_f32 = ref_f32 @ w3 + b3
    assert jnp.allclose(out, ref_f32, atol=5e-2, rtol=5e-2)

    print("KERNEL_OK")
</pallas_src>

<mosaic_0001>
module attributes {stable_mosaic.version = 11 : i64} {
  func.func @reward_mlp_kernel(%arg0: i32, %arg1: memref<16x128xf32, #tpu.memory_space<vmem>>, %arg2: memref<16x128xf32, #tpu.memory_space<vmem>>, %arg3: memref<128x128xbf16, #tpu.memory_space<vmem>>, %arg4: memref<128x128xbf16, #tpu.memory_space<vmem>>, %arg5: memref<1x128xf32, #tpu.memory_space<vmem>>, %arg6: memref<128x128xbf16, #tpu.memory_space<vmem>>, %arg7: memref<1x128xf32, #tpu.memory_space<vmem>>, %arg8: memref<128x8xbf16, #tpu.memory_space<vmem>>, %arg9: memref<1x8xf32, #tpu.memory_space<vmem>>, %arg10: memref<16x8xf32, #tpu.memory_space<vmem>>) attributes {dimension_semantics = [#tpu.dimension_semantics<parallel>], iteration_bounds = array<i64: 2>, scalar_prefetch = 0 : i64, scratch_operands = 0 : i64, tpu.core_type = #tpu.core_type<tc>, window_params = [{transform_indices = @transform_0, window_bounds = array<i64: 16, 128>}, {transform_indices = @transform_1, window_bounds = array<i64: 16, 128>}, {pipeline_mode = #tpu.pipeline_mode<synchronous>, transform_indices = @transform_2, window_bounds = array<i64: 128, 128>}, {pipeline_mode = #tpu.pipeline_mode<synchronous>, transform_indices = @transform_3, window_bounds = array<i64: 128, 128>}, {pipeline_mode = #tpu.pipeline_mode<synchronous>, transform_indices = @transform_4, window_bounds = array<i64: 1, 128>}, {pipeline_mode = #tpu.pipeline_mode<synchronous>, transform_indices = @transform_5, window_bounds = array<i64: 128, 128>}, {pipeline_mode = #tpu.pipeline_mode<synchronous>, transform_indices = @transform_6, window_bounds = array<i64: 1, 128>}, {pipeline_mode = #tpu.pipeline_mode<synchronous>, transform_indices = @transform_7, window_bounds = array<i64: 128, 8>}, {pipeline_mode = #tpu.pipeline_mode<synchronous>, transform_indices = @transform_8, window_bounds = array<i64: 1, 8>}, {transform_indices = @transform_9, window_bounds = array<i64: 16, 8>}]} {
    %c0 = arith.constant 0 : index
    %c0_0 = arith.constant 0 : index
    %0 = vector.load %arg1[%c0, %c0_0] : memref<16x128xf32, #tpu.memory_space<vmem>>, vector<16x128xf32>
    %1 = arith.truncf %0 : vector<16x128xf32> to vector<16x128xbf16>
    %c0_1 = arith.constant 0 : index
    %c0_2 = arith.constant 0 : index
    %2 = vector.load %arg2[%c0_1, %c0_2] : memref<16x128xf32, #tpu.memory_space<vmem>>, vector<16x128xf32>
    %3 = arith.truncf %2 : vector<16x128xf32> to vector<16x128xbf16>
    %c0_3 = arith.constant 0 : index
    %c0_4 = arith.constant 0 : index
    %4 = vector.load %arg3[%c0_3, %c0_4] : memref<128x128xbf16, #tpu.memory_space<vmem>>, vector<128x128xbf16>
    %cst = arith.constant dense<0.000000e+00> : vector<16x128xf32>
    %5 = tpu.matmul %1, %4, %cst {dimension_numbers = #tpu.dot_dimension_numbers<[1], [0], [0], [1], [0, 0, 1, 1], [], []>} : vector<16x128xbf16>, vector<128x128xbf16>, vector<16x128xf32> -> vector<16x128xf32>
    %c0_5 = arith.constant 0 : index
    %c0_6 = arith.constant 0 : index
    %6 = vector.load %arg4[%c0_5, %c0_6] : memref<128x128xbf16, #tpu.memory_space<vmem>>, vector<128x128xbf16>
    %cst_7 = arith.constant dense<0.000000e+00> : vector<16x128xf32>
    %7 = tpu.matmul %3, %6, %cst_7 {dimension_numbers = #tpu.dot_dimension_numbers<[1], [0], [0], [1], [0, 0, 1, 1], [], []>} : vector<16x128xbf16>, vector<128x128xbf16>, vector<16x128xf32> -> vector<16x128xf32>
    %8 = arith.addf %5, %7 : vector<16x128xf32>
    %c0_8 = arith.constant 0 : index
    %c0_9 = arith.constant 0 : index
    %9 = vector.load %arg5[%c0_8, %c0_9] : memref<1x128xf32, #tpu.memory_space<vmem>>, vector<1x128xf32>
    %10 = vector.broadcast %9 : vector<1x128xf32> to vector<16x128xf32>
    %11 = arith.addf %8, %10 : vector<16x128xf32>
    %cst_10 = arith.constant 0.000000e+00 : f32
    %12 = vector.broadcast %cst_10 : f32 to vector<16x128xf32>
    %13 = arith.maximumf %11, %12 : vector<16x128xf32>
    %14 = arith.truncf %13 : vector<16x128xf32> to vector<16x128xbf16>
    %c0_11 = arith.constant 0 : index
    %c0_12 = arith.constant 0 : index
    %15 = vector.load %arg6[%c0_11, %c0_12] : memref<128x128xbf16, #tpu.memory_space<vmem>>, vector<128x128xbf16>
    %cst_13 = arith.constant dense<0.000000e+00> : vector<16x128xf32>
    %16 = tpu.matmul %14, %15, %cst_13 {dimension_numbers = #tpu.dot_dimension_numbers<[1], [0], [0], [1], [0, 0, 1, 1], [], []>} : vector<16x128xbf16>, vector<128x128xbf16>, vector<16x128xf32> -> vector<16x128xf32>
    %c0_14 = arith.constant 0 : index
    %c0_15 = arith.constant 0 : index
    %17 = vector.load %arg7[%c0_14, %c0_15] : memref<1x128xf32, #tpu.memory_space<vmem>>, vector<1x128xf32>
    %18 = vector.broadcast %17 : vector<1x128xf32> to vector<16x128xf32>
    %19 = arith.addf %16, %18 : vector<16x128xf32>
    %cst_16 = arith.constant 0.000000e+00 : f32
    %20 = vector.broadcast %cst_16 : f32 to vector<16x128xf32>
    %21 = arith.maximumf %19, %20 : vector<16x128xf32>
    %22 = arith.truncf %21 : vector<16x128xf32> to vector<16x128xbf16>
    %c0_17 = arith.constant 0 : index
    %c0_18 = arith.constant 0 : index
    %23 = vector.load %arg8[%c0_17, %c0_18] : memref<128x8xbf16, #tpu.memory_space<vmem>>, vector<128x8xbf16>
    %cst_19 = arith.constant dense<0.000000e+00> : vector<16x8xf32>
    %24 = tpu.matmul %22, %23, %cst_19 {dimension_numbers = #tpu.dot_dimension_numbers<[1], [0], [0], [1], [0, 0, 1, 1], [], []>} : vector<16x128xbf16>, vector<128x8xbf16>, vector<16x8xf32> -> vector<16x8xf32>
    %c0_20 = arith.constant 0 : index
    %c0_21 = arith.constant 0 : index
    %25 = vector.load %arg9[%c0_20, %c0_21] : memref<1x8xf32, #tpu.memory_space<vmem>>, vector<1x8xf32>
    %26 = vector.broadcast %25 : vector<1x8xf32> to vector<16x8xf32>
    %27 = arith.addf %24, %26 : vector<16x8xf32>
    %c0_22 = arith.constant 0 : index
    %c0_23 = arith.constant 0 : index
    %28 = vector.load %arg10[%c0_22, %c0_23] : memref<16x8xf32, #tpu.memory_space<vmem>>, vector<16x8xf32>
    tpu.vector_store %arg10[%c0_22, %c0_23], %27 {strides = array<i32>} : memref<16x8xf32, #tpu.memory_space<vmem>>, vector<16x8xf32>,
    return
  }
  func.func @transform_0(%arg0: i32) -> (i32, i32) {
    %c0_i32 = arith.constant 0 : i32
    %c0_i32_0 = arith.constant 0 : i32
    return %arg0, %c0_i32 : i32, i32
  }
  func.func @transform_1(%arg0: i32) -> (i32, i32) {
    %c0_i32 = arith.constant 0 : i32
    %c0_i32_0 = arith.constant 0 : i32
    return %arg0, %c0_i32 : i32, i32
  }
  func.func @transform_2(%arg0: i32) -> (i32, i32) {
    %c0_i32 = arith.constant 0 : i32
    %c0_i32_0 = arith.constant 0 : i32
    %c0_i32_1 = arith.constant 0 : i32
    return %c0_i32, %c0_i32_0 : i32, i32
  }
  func.func @transform_3(%arg0: i32) -> (i32, i32) {
    %c0_i32 = arith.constant 0 : i32
    %c0_i32_0 = arith.constant 0 : i32
    %c0_i32_1 = arith.constant 0 : i32
    return %c0_i32, %c0_i32_0 : i32, i32
  }
  func.func @transform_4(%arg0: i32) -> (i32, i32) {
    %c0_i32 = arith.constant 0 : i32
    %c0_i32_0 = arith.constant 0 : i32
    %c0_i32_1 = arith.constant 0 : i32
    return %c0_i32, %c0_i32_0 : i32, i32
  }
  func.func @transform_5(%arg0: i32) -> (i32, i32) {
    %c0_i32 = arith.constant 0 : i32
    %c0_i32_0 = arith.constant 0 : i32
    %c0_i32_1 = arith.constant 0 : i32
    return %c0_i32, %c0_i32_0 : i32, i32
  }
  func.func @transform_6(%arg0: i32) -> (i32, i32) {
    %c0_i32 = arith.constant 0 : i32
    %c0_i32_0 = arith.constant 0 : i32
    %c0_i32_1 = arith.constant 0 : i32
    return %c0_i32, %c0_i32_0 : i32, i32
  }
  func.func @transform_7(%arg0: i32) -> (i32, i32) {
    %c0_i32 = arith.constant 0 : i32
    %c0_i32_0 = arith.constant 0 : i32
    %c0_i32_1 = arith.constant 0 : i32
    return %c0_i32, %c0_i32_0 : i32, i32
  }
  func.func @transform_8(%arg0: i32) -> (i32, i32) {
    %c0_i32 = arith.constant 0 : i32
    %c0_i32_0 = arith.constant 0 : i32
    %c0_i32_1 = arith.constant 0 : i32
    return %c0_i32, %c0_i32_0 : i32, i32
  }
  func.func @transform_9(%arg0: i32) -> (i32, i32) {
    %c0_i32 = arith.constant 0 : i32
    %c0_i32_0 = arith.constant 0 : i32
    return %arg0, %c0_i32 : i32, i32
  }
}

</mosaic_0001>

<llo_original>
// kernel: tpu_custom_call.1
$region0: #{tpu_custom_call.1}
  #allocation0 [shape = 'u32[]', space=smem, size = 0x4, offset = 0x4, fixed_abs, tag = 'smem constant byte address 0x4 - core index']
  #allocation1 [shape = 'u32[72,128]{1,0:T(1,128)}', space=vmem, size = 0x9000, scoped, tag = 'internal scratch']
  %s0 = inlined_call_operand.hbm [shape: f32[32,128], index: 0, kind: input, shape index: {}]
  %s1 = inlined_call_operand.hbm [shape: f32[32,128], index: 1, kind: input, shape index: {}]
  %s2 = inlined_call_operand.vmem [shape: bf16[128,128], index: 2, kind: input, shape index: {}]
  %s3 = inlined_call_operand.hbm [shape: bf16[128,128], index: 3, kind: input, shape index: {}]
  %s4 = inlined_call_operand.vmem [shape: f32[1,128], index: 4, kind: input, shape index: {}]
  %s5 = inlined_call_operand.hbm [shape: bf16[128,128], index: 5, kind: input, shape index: {}]
  %s6 = inlined_call_operand.vmem [shape: f32[1,128], index: 6, kind: input, shape index: {}]
  %s7 = inlined_call_operand.vmem [shape: bf16[128,8], index: 7, kind: input, shape index: {}]
  %s8 = inlined_call_operand.vmem [shape: f32[1,8], index: 8, kind: input, shape index: {}]
  %s9 = inlined_call_operand.vmem [shape: f32[32,8], index: 9, kind: output, shape index: {}]
  %s10 = sld [smem:[#allocation0]]
  $region85: #{tpu_custom_call.1} parent=0
    _
  %s12 = ssub.s32 1, %s10
  %s13 = scalar_select 0, %s12, %s10
  $region1: #{tpu_custom_call.1} parent=0
    #allocation2 [shape = 'u8[16384]{0}', space=vmem, size = 0x4000, scoped, tag = 'input window, operand 0']
    #allocation3 [shape = 's32[2]{0}', space=sflag, size = 0x8, scoped, tag = 'scoped memory for tpu_custom_call.1']
    #allocation4 [shape = 'u8[16384]{0}', space=vmem, size = 0x4000, scoped, tag = 'input window, operand 1']
    #allocation5 [shape = 's32[2]{0}', space=sflag, size = 0x8, scoped, tag = 'scoped memory for tpu_custom_call.1']
    #allocation6 [shape = 'u8[32768]{0}', space=vmem, size = 0x8000, scoped, tag = 'input window, operand 3, single buffered']
    #allocation7 [shape = 'u8[32768]{0}', space=vmem, size = 0x8000, scoped, tag = 'input window, operand 5, single buffered']
    #allocation8 [shape = 's32[1]{0}', space=sflag, size = 0x4, scoped, tag = 'scoped memory for tpu_custom_call.1']
    %14 = vsyncpa [#allocation3], 0
    %s15 = scalar_lea.sflag [#allocation3], 1
    %16 = vsyncpa %s15, 0
    %17 = vsyncpa [#allocation5], 0
    %s18 = scalar_lea.sflag [#allocation5], 1
    %19 = vsyncpa %s18, 0
    %20 = vsyncpa [#allocation8], 0
    loop: start=0, step=1, limit=4
    $region2: #{tpu_custom_call.1} parent=1 // loop_pre_header
      _
    $region3: #{tpu_custom_call.1} parent=1 // loop_header
      %s22 = sphi 0, %s26
      %p23 = scmp.ge.s32.totalorder %s22, 4
      %s32 = sphi 0, %s34
      %s35 = sphi 0, %s32
      %s36 = sphi 0, %s35
      %s52 = sphi 0, %s36
      %s58 = sphi 0, %s60
      %s61 = sphi 0, %s58
      %s62 = sphi 0, %s61
      %s78 = sphi 0, %s62
      %s82 = sphi 0, %s82
      %s84 = sphi 0, %s82
      %s85 = sphi 0, %s84
      %s99 = sphi 0, %s85
      %s103 = sphi 0, %s103
      %s105 = sphi 0, %s103
      %s106 = sphi 0, %s105
      %s120 = sphi 0, %s106
      %s124 = sphi 0, %s124
      %s126 = sphi 0, %s124
      %s127 = sphi 0, %s126
      %s141 = sphi 0, %s127
      %s145 = sphi 0, %s145
      %s147 = sphi 0, %s145
      %s148 = sphi 0, %s147
      %s162 = sphi 0, %s148
      %s166 = sphi 0, %s166
      %s168 = sphi 0, %s166
      %s169 = sphi 0, %s168
      %s183 = sphi 0, %s169
      %s187 = sphi 0, %s187
      %s189 = sphi 0, %s187
      %s190 = sphi 0, %s189
      %s204 = sphi 0, %s190
      %s208 = sphi 0, %s208
      %s210 = sphi 0, %s208
      %s211 = sphi 0, %s210
      %s225 = sphi 0, %s211
      %s231 = sphi 0, %s233
      %s234 = sphi 0, %s231
      %s235 = sphi 0, %s234
      %s251 = sphi 0, %s235
    $region4: #{tpu_custom_call.1} parent=1 // loop_header_branch
      %25 = sbr.rel (%p23) target = $region8
    $region5: #{tpu_custom_call.1} parent=1 // loop_body
      %s27 = ssub.s32 %s22, 1
      %s28 = ssub.s32 %s22, 2
      %s29 = sadd.s32 %s22, 1
      %s30 = ssub.s32 %s22, %s29
      %p31 = scmp.eq.s32.totalorder %s30, 0
      %s33 = sadd.s32 %s32, 1
      %s34 = scalar_select %p31, %s32, %s33
      %p37 = pneg %p31
      %p38 = scmp.eq.s32.totalorder %s22, 1
      %p39 = por %p37, %p38
      %p40 = scmp.ne.s32.totalorder %s32, %s35
      %p41 = scmp.eq.s32.totalorder %s22, 0
      %p42 = por %p40, %p41
      %p43 = scmp.ne.s32.totalorder %s32, %s35
      %p44 = scmp.eq.s32.totalorder %s27, 1
      %p45 = por %p43, %p44
      %p46 = scmp.ne.s32.totalorder %s35, %s36
      %p47 = scmp.eq.s32.totalorder %s27, 0
      %p48 = por %p46, %p47
      %p49 = scmp.ne.s32.totalorder %s35, %s36
      %p50 = scmp.eq.s32.totalorder %s28, 1
      %p51 = por %p49, %p50
      %p53 = scmp.ne.s32.totalorder %s36, %s52
      %p54 = scmp.eq.s32.totalorder %s28, 0
      %p55 = por %p53, %p54
      %s56 = ssub.s32 %s22, %s29
      %p57 = scmp.eq.s32.totalorder %s56, 0
      %s59 = sadd.s32 %s58, 1
      %s60 = scalar_select %p57, %s58, %s59
      %p63 = pneg %p57
      %p64 = scmp.eq.s32.totalorder %s22, 1
      %p65 = por %p63, %p64
      %p66 = scmp.ne.s32.totalorder %s58, %s61
      %p67 = scmp.eq.s32.totalorder %s22, 0
      %p68 = por %p66, %p67
      %p69 = scmp.ne.s32.totalorder %s58, %s61
      %p70 = scmp.eq.s32.totalorder %s27, 1
      %p71 = por %p69, %p70
      %p72 = scmp.ne.s32.totalorder %s61, %s62
      %p73 = scmp.eq.s32.totalorder %s27, 0
      %p74 = por %p72, %p73
      %p75 = scmp.ne.s32.totalorder %s61, %s62
      %p76 = scmp.eq.s32.totalorder %s28, 1
      %p77 = por %p75, %p76
      %p79 = scmp.ne.s32.totalorder %s62, %s78
      %p80 = scmp.eq.s32.totalorder %s28, 0
      %p81 = por %p79, %p80
      %s83 = sadd.s32 %s82, 1
      %p86 = scmp.eq.s32.totalorder %s22, 1
      %p87 = scmp.ne.s32.totalorder %s82, %s84
      %p88 = scmp.eq.s32.totalorder %s22, 0
      %p89 = por %p87, %p88
      %p90 = scmp.ne.s32.totalorder %s82, %s84
      %p91 = scmp.eq.s32.totalorder %s27, 1
      %p92 = por %p90, %p91
      %p93 = scmp.ne.s32.totalorder %s84, %s85
      %p94 = scmp.eq.s32.totalorder %s27, 0
      %p95 = por %p93, %p94
      %p96 = scmp.ne.s32.totalorder %s84, %s85
      %p97 = scmp.eq.s32.totalorder %s28, 1
      %p98 = por %p96, %p97
      %p100 = scmp.ne.s32.totalorder %s85, %s99
      %p101 = scmp.eq.s32.totalorder %s28, 0
      %p102 = por %p100, %p101
      %s104 = sadd.s32 %s103, 1
      %p107 = scmp.eq.s32.totalorder %s22, 1
      %p108 = scmp.ne.s32.totalorder %s103, %s105
      %p109 = scmp.eq.s32.totalorder %s22, 0
      %p110 = por %p108, %p109
      %p111 = scmp.ne.s32.totalorder %s103, %s105
      %p112 = scmp.eq.s32.totalorder %s27, 1
      %p113 = por %p111, %p112
      %p114 = scmp.ne.s32.totalorder %s105, %s106
      %p115 = scmp.eq.s32.totalorder %s27, 0
      %p116 = por %p114, %p115
      %p117 = scmp.ne.s32.totalorder %s105, %s106
      %p118 = scmp.eq.s32.totalorder %s28, 1
      %p119 = por %p117, %p118
      %p121 = scmp.ne.s32.totalorder %s106, %s120
      %p122 = scmp.eq.s32.totalorder %s28, 0
      %p123 = por %p121, %p122
      %s125 = sadd.s32 %s124, 1
      %p128 = scmp.eq.s32.totalorder %s22, 1
      %p129 = scmp.ne.s32.totalorder %s124, %s126
      %p130 = scmp.eq.s32.totalorder %s22, 0
      %p131 = por %p129, %p130
      %p132 = scmp.ne.s32.totalorder %s124, %s126
      %p133 = scmp.eq.s32.totalorder %s27, 1
      %p134 = por %p132, %p133
      %p135 = scmp.ne.s32.totalorder %s126, %s127
      %p136 = scmp.eq.s32.totalorder %s27, 0
      %p137 = por %p135, %p136
      %p138 = scmp.ne.s32.totalorder %s126, %s127
      %p139 = scmp.eq.s32.totalorder %s28, 1
      %p140 = por %p138, %p139
      %p142 = scmp.ne.s32.totalorder %s127, %s141
      %p143 = scmp.eq.s32.totalorder %s28, 0
      %p144 = por %p142, %p143
      %s146 = sadd.s32 %s145, 1
      %p149 = scmp.eq.s32.totalorder %s22, 1
      %p150 = scmp.ne.s32.totalorder %s145, %s147
      %p151 = scmp.eq.s32.totalorder %s22, 0
      %p152 = por %p150, %p151
      %p153 = scmp.ne.s32.totalorder %s145, %s147
      %p154 = scmp.eq.s32.totalorder %s27, 1
      %p155 = por %p153, %p154
      %p156 = scmp.ne.s32.totalorder %s147, %s148
      %p157 = scmp.eq.s32.totalorder %s27, 0
      %p158 = por %p156, %p157
      %p159 = scmp.ne.s32.totalorder %s147, %s148
      %p160 = scmp.eq.s32.totalorder %s28, 1
      %p161 = por %p159, %p160
      %p163 = scmp.ne.s32.totalorder %s148, %s162
      %p164 = scmp.eq.s32.totalorder %s28, 0
      %p165 = por %p163, %p164
      %s167 = sadd.s32 %s166, 1
      %p170 = scmp.eq.s32.totalorder %s22, 1
      %p171 = scmp.ne.s32.totalorder %s166, %s168
      %p172 = scmp.eq.s32.totalorder %s22, 0
      %p173 = por %p171, %p172
      %p174 = scmp.ne.s32.totalorder %s166, %s168
      %p175 = scmp.eq.s32.totalorder %s27, 1
      %p176 = por %p174, %p175
      %p177 = scmp.ne.s32.totalorder %s168, %s169
      %p178 = scmp.eq.s32.totalorder %s27, 0
      %p179 = por %p177, %p178
      %p180 = scmp.ne.s32.totalorder %s168, %s169
      %p181 = scmp.eq.s32.totalorder %s28, 1
      %p182 = por %p180, %p181
      %p184 = scmp.ne.s32.totalorder %s169, %s183
      %p185 = scmp.eq.s32.totalorder %s28, 0
      %p186 = por %p184, %p185
      %s188 = sadd.s32 %s187, 1
      %p191 = scmp.eq.s32.totalorder %s22, 1
      %p192 = scmp.ne.s32.totalorder %s187, %s189
      %p193 = scmp.eq.s32.totalorder %s22, 0
      %p194 = por %p192, %p193
      %p195 = scmp.ne.s32.totalorder %s187, %s189
      %p196 = scmp.eq.s32.totalorder %s27, 1
      %p197 = por %p195, %p196
      %p198 = scmp.ne.s32.totalorder %s189, %s190
      %p199 = scmp.eq.s32.totalorder %s27, 0
      %p200 = por %p198, %p199
      %p201 = scmp.ne.s32.totalorder %s189, %s190
      %p202 = scmp.eq.s32.totalorder %s28, 1
      %p203 = por %p201, %p202
      %p205 = scmp.ne.s32.totalorder %s190, %s204
      %p206 = scmp.eq.s32.totalorder %s28, 0
      %p207 = por %p205, %p206
      %s209 = sadd.s32 %s208, 1
      %p212 = scmp.eq.s32.totalorder %s22, 1
      %p213 = scmp.ne.s32.totalorder %s208, %s210
      %p214 = scmp.eq.s32.totalorder %s22, 0
      %p215 = por %p213, %p214
      %p216 = scmp.ne.s32.totalorder %s208, %s210
      %p217 = scmp.eq.s32.totalorder %s27, 1
      %p218 = por %p216, %p217
      %p219 = scmp.ne.s32.totalorder %s210, %s211
      %p220 = scmp.eq.s32.totalorder %s27, 0
      %p221 = por %p219, %p220
      %p222 = scmp.ne.s32.totalorder %s210, %s211
      %p223 = scmp.eq.s32.totalorder %s28, 1
      %p224 = por %p222, %p223
      %p226 = scmp.ne.s32.totalorder %s211, %s225
      %p227 = scmp.eq.s32.totalorder %s28, 0
      %p228 = por %p226, %p227
      %s229 = ssub.s32 %s22, %s29
      %p230 = scmp.eq.s32.totalorder %s229, 0
      %s232 = sadd.s32 %s231, 1
      %s233 = scalar_select %p230, %s231, %s232
      %p236 = pneg %p230
      %p237 = scmp.eq.s32.totalorder %s22, 1
      %p238 = por %p236, %p237
      %p239 = scmp.ne.s32.totalorder %s231, %s234
      %p240 = scmp.eq.s32.totalorder %s22, 0
      %p241 = por %p239, %p240
      %p242 = scmp.ne.s32.totalorder %s231, %s234
      %p243 = scmp.eq.s32.totalorder %s27, 1
      %p244 = por %p242, %p243
      %p245 = scmp.ne.s32.totalorder %s234, %s235
      %p246 = scmp.eq.s32.totalorder %s27, 0
      %p247 = por %p245, %p246
      %p248 = scmp.ne.s32.totalorder %s234, %s235
      %p249 = scmp.eq.s32.totalorder %s28, 1
      %p250 = por %p248, %p249
      %p252 = scmp.ne.s32.totalorder %s235, %s251
      %p253 = scmp.eq.s32.totalorder %s28, 0
      %p254 = por %p252, %p253
      %p255 = scmp.le.s32.totalorder 1, %s22
      %p256 = scmp.lt.s32.totalorder %s22, 3
      %p257 = pnand %p255, %p256
      %p258 = pneg %p257
      // Predicated region
      $region9: #{tpu_custom_call.1} parent=5 // pred_check
        _
      $region10: #{tpu_custom_call.1} parent=5 // pred_check_branch
        %260 = sbr.rel (%p257) target = $region12
      $region11: #{tpu_custom_call.1} parent=5 // pred_region
        %s261 = ssub.s32 %s22, 1
        // Predicated region
        $region13: #{tpu_custom_call.1} parent=11 // pred_check
          %p262 = pneg %p95
        $region14: #{tpu_custom_call.1} parent=11 // pred_check_branch
          %264 = sbr.rel (%p262) target = $region16
        $region15: #{tpu_custom_call.1} parent=11 // pred_region
          _
        $region16: #{tpu_custom_call.1} parent=11 // pred_fallthru
          _
        // Predicated region
        $region17: #{tpu_custom_call.1} parent=11 // pred_check
          %p265 = pneg %p116
        $region18: #{tpu_custom_call.1} parent=11 // pred_check_branch
          %267 = sbr.rel (%p265) target = $region20
        $region19: #{tpu_custom_call.1} parent=11 // pred_region
          %269 = vsyncadd [#allocation5], 0
          %s270 = sshll.u32 %s3, 4
          %s271 = int_to_ptr.hbm [resolvable:$true] %s270
          %s272 = sshll.u32 [#allocation6], 4
          %s273 = int_to_ptr.vmem [resolvable:$true] %s272
          %278 = dma.hbm_to_vmem [thread:$0]  %s271, 1024, %s273, [#allocation5], 64, 64, 4
        $region20: #{tpu_custom_call.1} parent=11 // pred_fallthru
          _
        // Predicated region
        $region21: #{tpu_custom_call.1} parent=11 // pred_check
          %p279 = pneg %p137
        $region22: #{tpu_custom_call.1} parent=11 // pred_check_branch
          %281 = sbr.rel (%p279) target = $region24
        $region23: #{tpu_custom_call.1} parent=11 // pred_region
          _
        $region24: #{tpu_custom_call.1} parent=11 // pred_fallthru
          _
        // Predicated region
        $region25: #{tpu_custom_call.1} parent=11 // pred_check
          %p282 = pneg %p158
        $region26: #{tpu_custom_call.1} parent=11 // pred_check_branch
          %284 = sbr.rel (%p282) target = $region28
        $region27: #{tpu_custom_call.1} parent=11 // pred_region
          %286 = vsyncadd [#allocation8], 0
          %s287 = sshll.u32 %s5, 4
          %s288 = int_to_ptr.hbm [resolvable:$true] %s287
          %s289 = sshll.u32 [#allocation7], 4
          %s290 = int_to_ptr.vmem [resolvable:$true] %s289
          %295 = dma.hbm_to_vmem [thread:$0]  %s288, 1024, %s290, [#allocation8], 64, 64, 4
        $region28: #{tpu_custom_call.1} parent=11 // pred_fallthru
          _
        // Predicated region
        $region29: #{tpu_custom_call.1} parent=11 // pred_check
          %p296 = pneg %p179
        $region30: #{tpu_custom_call.1} parent=11 // pred_check_branch
          %298 = sbr.rel (%p296) target = $region32
        $region31: #{tpu_custom_call.1} parent=11 // pred_region
          _
        $region32: #{tpu_custom_call.1} parent=11 // pred_fallthru
          _
        // Predicated region
        $region33: #{tpu_custom_call.1} parent=11 // pred_check
          %p299 = pneg %p200
        $region34: #{tpu_custom_call.1} parent=11 // pred_check_branch
          %301 = sbr.rel (%p299) target = $region36
        $region35: #{tpu_custom_call.1} parent=11 // pred_region
          _
        $region36: #{tpu_custom_call.1} parent=11 // pred_fallthru
          _
        // Predicated region
        $region37: #{tpu_custom_call.1} parent=11 // pred_check
          %p302 = pneg %p221
        $region38: #{tpu_custom_call.1} parent=11 // pred_check_branch
          %304 = sbr.rel (%p302) target = $region40
        $region39: #{tpu_custom_call.1} parent=11 // pred_region
          _
        $region40: #{tpu_custom_call.1} parent=11 // pred_fallthru
          _
      $region12: #{tpu_custom_call.1} parent=5 // pred_fallthru
        _
      %p305 = scmp.lt.s32.totalorder %s22, 2
      // Predicated region
      $region41: #{tpu_custom_call.1} parent=5 // pred_check
        %p306 = pneg %p305
      $region42: #{tpu_custom_call.1} parent=5 // pred_check_branch
        %308 = sbr.rel (%p306) target = $region44
      $region43: #{tpu_custom_call.1} parent=5 // pred_region
        // Predicated region
        $region45: #{tpu_custom_call.1} parent=43 // pred_check
          %p309 = pneg %p42
        $region46: #{tpu_custom_call.1} parent=43 // pred_check_branch
          %311 = sbr.rel (%p309) target = $region48
        $region47: #{tpu_custom_call.1} parent=43 // pred_region
          %s312 = sand.u32 %s32, 1
          %s313 = scalar_lea.sflag [#allocation3], %s312
          %s314 = sand.u32 %s32, 1
          %s315 = smul.addr %s314, 16
          %s316 = scalar_lea.vmem [#allocation2], %s315
          %s317 = smul.u32 2, %s22
          %319 = vsyncadd %s313, 0
          %s320 = smul.addr %s317, 8
          %s321 = scalar_lea.hbm %s0, %s320
          %s322 = sshll.u32 %s321, 4
          %s323 = int_to_ptr.hbm [resolvable:$true] %s322
          %s324 = sshll.u32 %s316, 4
          %s325 = int_to_ptr.vmem [resolvable:$true] %s324
          %330 = dma.hbm_to_vmem [thread:$0]  %s323, 256, %s325, %s313, 128, 128, 8
        $region48: #{tpu_custom_call.1} parent=43 // pred_fallthru
          _
        // Predicated region
        $region49: #{tpu_custom_call.1} parent=43 // pred_check
          %p331 = pneg %p68
        $region50: #{tpu_custom_call.1} parent=43 // pred_check_branch
          %333 = sbr.rel (%p331) target = $region52
        $region51: #{tpu_custom_call.1} parent=43 // pred_region
          %s334 = sand.u32 %s22, 1
          %s335 = scalar_lea.sflag [#allocation5], %s334
          %s336 = sand.u32 %s58, 1
          %s337 = smul.addr %s336, 16
          %s338 = scalar_lea.vmem [#allocation4], %s337
          %s339 = smul.u32 2, %s22
          %341 = vsyncadd %s335, 0
          %s342 = smul.addr %s339, 8
          %s343 = scalar_lea.hbm %s1, %s342
          %s344 = sshll.u32 %s343, 4
          %s345 = int_to_ptr.hbm [resolvable:$true] %s344
          %s346 = sshll.u32 %s338, 4
          %s347 = int_to_ptr.vmem [resolvable:$true] %s346
          %352 = dma.hbm_to_vmem [thread:$0]  %s345, 256, %s347, %s335, 128, 128, 8
        $region52: #{tpu_custom_call.1} parent=43 // pred_fallthru
          _
      $region44: #{tpu_custom_call.1} parent=5 // pred_fallthru
        _
      %p353 = scmp.le.s32.totalorder 1, %s22
      %p354 = scmp.lt.s32.totalorder %s22, 3
      %p355 = pnand %p353, %p354
      %p356 = pneg %p355
      // Predicated region
      $region53: #{tpu_custom_call.1} parent=5 // pred_check
        _
      $region54: #{tpu_custom_call.1} parent=5 // pred_check_branch
        %358 = sbr.rel (%p355) target = $region56
      $region55: #{tpu_custom_call.1} parent=5 // pred_region
        %s359 = ssub.s32 %s22, 1
        %s360 = sand.u32 %s35, 1
        %s361 = scalar_lea.sflag [#allocation3], %s360
        %s362 = sand.u32 %s35, 1
        %s363 = smul.addr %s362, 16
        %s364 = scalar_lea.vmem [#allocation2], %s363
        // Predicated region
        $region57: #{tpu_custom_call.1} parent=55 // pred_check
          %p365 = pneg %p48
        $region58: #{tpu_custom_call.1} parent=55 // pred_check_branch
          %367 = sbr.rel (%p365) target = $region60
        $region59: #{tpu_custom_call.1} parent=55 // pred_region
          %369 = dma.done %s361, 256
        $region60: #{tpu_custom_call.1} parent=55 // pred_fallthru
          _
        %s370 = sand.u32 %s27, 1
        %s371 = scalar_lea.sflag [#allocation5], %s370
        %s372 = sand.u32 %s61, 1
        %s373 = smul.addr %s372, 16
        %s374 = scalar_lea.vmem [#allocation4], %s373
        // Predicated region
        $region61: #{tpu_custom_call.1} parent=55 // pred_check
          %p375 = pneg %p74
        $region62: #{tpu_custom_call.1} parent=55 // pred_check_branch
          %377 = sbr.rel (%p375) target = $region64
        $region63: #{tpu_custom_call.1} parent=55 // pred_region
          %379 = dma.done %s371, 256
        $region64: #{tpu_custom_call.1} parent=55 // pred_fallthru
          _
        // Predicated region
        $region65: #{tpu_custom_call.1} parent=55 // pred_check
          %p380 = pneg %p116
        $region66: #{tpu_custom_call.1} parent=55 // pred_check_branch
          %382 = sbr.rel (%p380) target = $region68
        $region67: #{tpu_custom_call.1} parent=55 // pred_region
          %384 = dma.done [#allocation5], 1024
        $region68: #{tpu_custom_call.1} parent=55 // pred_fallthru
          _
        // Predicated region
        $region69: #{tpu_custom_call.1} parent=55 // pred_check
          %p385 = pneg %p158
        $region70: #{tpu_custom_call.1} parent=55 // pred_check_branch
          %387 = sbr.rel (%p385) target = $region72
        $region71: #{tpu_custom_call.1} parent=55 // pred_region
          %389 = dma.done [#allocation8], 1024
        $region72: #{tpu_custom_call.1} parent=55 // pred_fallthru
          _
        %s390 = sand.u32 %s35, 1
        %s391 = scalar_lea.sflag [#allocation3], %s390
        %s392 = sand.u32 %s35, 1
        %s393 = smul.addr %s392, 16
        %s394 = scalar_lea.vmem [#allocation2], %s393
        %p395 = pneg %p48
        %p396 = pneg %p45
        %s397 = sand.u32 %s27, 1
        %s398 = scalar_lea.sflag [#allocation5], %s397
        %s399 = sand.u32 %s61, 1
        %s400 = smul.addr %s399, 16
        %s401 = scalar_lea.vmem [#allocation4], %s400
        %p402 = pneg %p74
        %p403 = pneg %p71
        %p404 = pneg %p95
        %p405 = pneg %p92
        %p406 = pneg %p116
        %p407 = pneg %p113
        %p408 = pneg %p137
        %p409 = pneg %p134
        %p410 = pneg %p158
        %p411 = pneg %p155
        %p412 = pneg %p179
        %p413 = pneg %p176
        %p414 = pneg %p200
        %p415 = pneg %p197
        %p416 = pneg %p221
        %p417 = pneg %p218
        %p418 = pneg %p247
        %p419 = pneg %p244
        %s420 = smul.u32 2, %s27
        %p421 = scmp.lt.s32.totalorder %s420, 3
        %s422 = scalar_select %p421, %s420, 3
        %s423 = smul.addr %s422, 8
        %s424 = scalar_lea.vmem %s9, %s423
        %s425 = smul.u32 2, %s27
        %s426 = smul.u32 2, %s27
        %s427 = smul.u32 2, %s27
        %p428 = scmp.lt.s32.totalorder %s427, 3
        %s429 = scalar_select %p428, %s427, 3
        %s430 = smul.addr %s429, 8
        %s431 = scalar_lea.vmem %s9, %s430
        %s432 = smul.u32 2, %s27
        %v433 = vld [vmem:[%s364] sm:$0xff]
        %v434 = vld [vmem:[%s364 + $0x8] sm:$0xff]
        %v435 = vpack.c.bf16 %v434, %v433
        %v436 = vld [vmem:[%s374] sm:$0xff]
        %v437 = vld [vmem:[%s374 + $0x8] sm:$0xff]
        %v438 = vpack.c.bf16 %v437, %v436
        %v439 = vld [vmem:[%s2] sm:$0xf]
        %v440 = vld [vmem:[%s2 + $0x4] sm:$0xf]
        %v441 = vld [vmem:[%s2 + $0x8] sm:$0xf]
        %v442 = vld [vmem:[%s2 + $0xc] sm:$0xf]
        %v443 = vld [vmem:[%s2 + $0x10] sm:$0xf]
        %v444 = vld [vmem:[%s2 + $0x14] sm:$0xf]
        %v445 = vld [vmem:[%s2 + $0x18] sm:$0xf]
        %v446 = vld [vmem:[%s2 + $0x1c] sm:$0xf]
        %v447 = vld [vmem:[%s2 + $0x20] sm:$0xf]
        %v448 = vld [vmem:[%s2 + $0x24] sm:$0xf]
        %v449 = vld [vmem:[%s2 + $0x28] sm:$0xf]
        %v450 = vld [vmem:[%s2 + $0x2c] sm:$0xf]
        %v451 = vld [vmem:[%s2 + $0x30] sm:$0xf]
        %v452 = vld [vmem:[%s2 + $0x34] sm:$0xf]
        %v453 = vld [vmem:[%s2 + $0x38] sm:$0xf]
        %v454 = vld [vmem:[%s2 + $0x3c] sm:$0xf]
        %v455 = vld [vmem:[#allocation6] sm:$0xf]
        %v456 = vld [vmem:[#allocation6 + $0x4] sm:$0xf]
        %v457 = vld [vmem:[#allocation6 + $0x8] sm:$0xf]
        %v458 = vld [vmem:[#allocation6 + $0xc] sm:$0xf]
        %v459 = vld [vmem:[#allocation6 + $0x10] sm:$0xf]
        %v460 = vld [vmem:[#allocation6 + $0x14] sm:$0xf]
        %v461 = vld [vmem:[#allocation6 + $0x18] sm:$0xf]
        %v462 = vld [vmem:[#allocation6 + $0x1c] sm:$0xf]
        %v463 = vld [vmem:[#allocation6 + $0x20] sm:$0xf]
        %v464 = vld [vmem:[#allocation6 + $0x24] sm:$0xf]
        %v465 = vld [vmem:[#allocation6 + $0x28] sm:$0xf]
        %v466 = vld [vmem:[#allocation6 + $0x2c] sm:$0xf]
        %v467 = vld [vmem:[#allocation6 + $0x30] sm:$0xf]
        %v468 = vld [vmem:[#allocation6 + $0x34] sm:$0xf]
        %v469 = vld [vmem:[#allocation6 + $0x38] sm:$0xf]
        %v470 = vld [vmem:[#allocation6 + $0x3c] sm:$0xf]
        %v487 = vunpack.c.l.b16 %v455
        %v488 = vunpack.c.l.b16 %v456
        %v489 = vunpack.c.l.b16 %v457
        %v490 = vunpack.c.l.b16 %v458
        %v491 = vunpack.c.l.b16 %v459
        %v492 = vunpack.c.l.b16 %v460
        %v493 = vunpack.c.l.b16 %v461
        %v494 = vunpack.c.l.b16 %v462
        %v495 = vunpack.c.l.b16 %v463
        %v496 = vunpack.c.l.b16 %v464
        %v497 = vunpack.c.l.b16 %v465
        %v498 = vunpack.c.l.b16 %v466
        %v499 = vunpack.c.l.b16 %v467
        %v500 = vunpack.c.l.b16 %v468
        %v501 = vunpack.c.l.b16 %v469
        %v502 = vunpack.c.l.b16 %v470
        %v503 = vpack.c.b16 %v488, %v487
        %v504 = vpack.c.b16 %v490, %v489
        %v505 = vpack.c.b16 %v492, %v491
        %v506 = vpack.c.b16 %v494, %v493
        %v507 = vpack.c.b16 %v496, %v495
        %v508 = vpack.c.b16 %v498, %v497
        %v509 = vpack.c.b16 %v500, %v499
        %v510 = vpack.c.b16 %v502, %v501
        %519 = vmatpush.bf16.msra.mxu0 %v510
        %520 = vmatpush.bf16.msra.mxu0 %v509
        %521 = vmatpush.bf16.msra.mxu0 %v508
        %522 = vmatpush.bf16.msra.mxu0 %v507
        %523 = vmatpush.bf16.msra.mxu0 %v506
        %524 = vmatpush.bf16.msra.mxu0 %v505
        %525 = vmatpush.bf16.msra.mxu0 %v504
        %526 = vmatpush.bf16.msra.mxu0 %v503
        %527 = vmatmul.bf16.gmra.mxu0 %v438
        %v528 = vpop.f32.mrf.mxu0
        %v529 = vadd.f32 0.0, %v528
        %v530 = vpop.f32.mrf.mxu0
        %v531 = vadd.f32 0.0, %v530
        %532 = vdwg.mxu0
        %v549 = vunpack.c.l.b16 %v439
        %v550 = vunpack.c.l.b16 %v440
        %v551 = vunpack.c.l.b16 %v441
        %v552 = vunpack.c.l.b16 %v442
        %v553 = vunpack.c.l.b16 %v443
        %v554 = vunpack.c.l.b16 %v444
        %v555 = vunpack.c.l.b16 %v445
        %v556 = vunpack.c.l.b16 %v446
        %v557 = vunpack.c.l.b16 %v447
        %v558 = vunpack.c.l.b16 %v448
        %v559 = vunpack.c.l.b16 %v449
        %v560 = vunpack.c.l.b16 %v450
        %v561 = vunpack.c.l.b16 %v451
        %v562 = vunpack.c.l.b16 %v452
        %v563 = vunpack.c.l.b16 %v453
        %v564 = vunpack.c.l.b16 %v454
        %v565 = vpack.c.b16 %v550, %v549
        %v566 = vpack.c.b16 %v552, %v551
        %v567 = vpack.c.b16 %v554, %v553
        %v568 = vpack.c.b16 %v556, %v555
        %v569 = vpack.c.b16 %v558, %v557
        %v570 = vpack.c.b16 %v560, %v559
        %v571 = vpack.c.b16 %v562, %v561
        %v572 = vpack.c.b16 %v564, %v563
        %581 = vmatpush.bf16.msra.mxu0 %v572
        %582 = vmatpush.bf16.msra.mxu0 %v571
        %583 = vmatpush.bf16.msra.mxu0 %v570
        %584 = vmatpush.bf16.msra.mxu0 %v569
        %585 = vmatpush.bf16.msra.mxu0 %v568
        %586 = vmatpush.bf16.msra.mxu0 %v567
        %587 = vmatpush.bf16.msra.mxu0 %v566
        %588 = vmatpush.bf16.msra.mxu0 %v565
        %589 = vmatmul.bf16.gmra.mxu0 %v435
        %v590 = vpop.f32.mrf.mxu0
        %v591 = vadd.f32 %v529, %v590
        %v592 = vpop.f32.mrf.mxu0
        %v593 = vadd.f32 %v531, %v592
        %594 = vdwg.mxu0
        %v595 = vld [vmem:[%s4] sm:$0x1]
        %v597 = vperm.slane %v595, 0
        %v599 = vadd.f32 %v591, %v597
        %v600 = vadd.f32 %v593, %v597
        %v601 = vmax.f32 %v599, 0.0
        %v602 = vmax.f32 %v600, 0.0
        %v603 = vpack.c.bf16 %v602, %v601
        %v604 = vld [vmem:[#allocation7] sm:$0xf]
        %v605 = vld [vmem:[#allocation7 + $0x4] sm:$0xf]
        %v606 = vld [vmem:[#allocation7 + $0x8] sm:$0xf]
        %v607 = vld [vmem:[#allocation7 + $0xc] sm:$0xf]
        %v608 = vld [vmem:[#allocation7 + $0x10] sm:$0xf]
        %v609 = vld [vmem:[#allocation7 + $0x14] sm:$0xf]
        %v610 = vld [vmem:[#allocation7 + $0x18] sm:$0xf]
        %v611 = vld [vmem:[#allocation7 + $0x1c] sm:$0xf]
        %v612 = vld [vmem:[#allocation7 + $0x20] sm:$0xf]
        %v613 = vld [vmem:[#allocation7 + $0x24] sm:$0xf]
        %v614 = vld [vmem:[#allocation7 + $0x28] sm:$0xf]
        %v615 = vld [vmem:[#allocation7 + $0x2c] sm:$0xf]
        %v616 = vld [vmem:[#allocation7 + $0x30] sm:$0xf]
        %v617 = vld [vmem:[#allocation7 + $0x34] sm:$0xf]
        %v618 = vld [vmem:[#allocation7 + $0x38] sm:$0xf]
        %v619 = vld [vmem:[#allocation7 + $0x3c] sm:$0xf]
        %v620 = vld [vmem:[%s6] sm:$0x1]
        %v622 = vperm.slane %v620, 0
        %v640 = vunpack.c.l.b16 %v604
        %v641 = vunpack.c.l.b16 %v605
        %v642 = vunpack.c.l.b16 %v606
        %v643 = vunpack.c.l.b16 %v607
        %v644 = vunpack.c.l.b16 %v608
        %v645 = vunpack.c.l.b16 %v609
        %v646 = vunpack.c.l.b16 %v610
        %v647 = vunpack.c.l.b16 %v611
        %v648 = vunpack.c.l.b16 %v612
        %v649 = vunpack.c.l.b16 %v613
        %v650 = vunpack.c.l.b16 %v614
        %v651 = vunpack.c.l.b16 %v615
        %v652 = vunpack.c.l.b16 %v616
        %v653 = vunpack.c.l.b16 %v617
        %v654 = vunpack.c.l.b16 %v618
        %v655 = vunpack.c.l.b16 %v619
        %v656 = vpack.c.b16 %v641, %v640
        %v657 = vpack.c.b16 %v643, %v642
        %v658 = vpack.c.b16 %v645, %v644
        %v659 = vpack.c.b16 %v647, %v646
        %v660 = vpack.c.b16 %v649, %v648
        %v661 = vpack.c.b16 %v651, %v650
        %v662 = vpack.c.b16 %v653, %v652
        %v663 = vpack.c.b16 %v655, %v654
        %672 = vmatpush.bf16.msra.mxu0 %v663
        %673 = vmatpush.bf16.msra.mxu0 %v662
        %674 = vmatpush.bf16.msra.mxu0 %v661
        %675 = vmatpush.bf16.msra.mxu0 %v660
        %676 = vmatpush.bf16.msra.mxu0 %v659
        %677 = vmatpush.bf16.msra.mxu0 %v658
        %678 = vmatpush.bf16.msra.mxu0 %v657
        %679 = vmatpush.bf16.msra.mxu0 %v656
        %680 = vmatmul.bf16.gmra.mxu0 %v603
        %v681 = vpop.f32.mrf.mxu0
        %v682 = vadd.f32 %v622, %v681
        %v683 = vpop.f32.mrf.mxu0
        %v684 = vadd.f32 %v622, %v683
        %685 = vdwg.mxu0
        %v686 = vmax.f32 %v682, 0.0
        %v687 = vmax.f32 %v684, 0.0
        %v688 = vpack.c.bf16 %v687, %v686
        %v689 = vld [vmem:[%s7] sm:$0xf]
        %v690 = vld [vmem:[%s7 + $0x4] sm:$0xf]
        %v691 = vld [vmem:[%s7 + $0x8] sm:$0xf]
        %v692 = vld [vmem:[%s7 + $0xc] sm:$0xf]
        %v693 = vld [vmem:[%s7 + $0x10] sm:$0xf]
        %v694 = vld [vmem:[%s7 + $0x14] sm:$0xf]
        %v695 = vld [vmem:[%s7 + $0x18] sm:$0xf]
        %v696 = vld [vmem:[%s7 + $0x1c] sm:$0xf]
        %v697 = vld [vmem:[%s7 + $0x20] sm:$0xf]
        %v698 = vld [vmem:[%s7 + $0x24] sm:$0xf]
        %v699 = vld [vmem:[%s7 + $0x28] sm:$0xf]
        %v700 = vld [vmem:[%s7 + $0x2c] sm:$0xf]
        %v701 = vld [vmem:[%s7 + $0x30] sm:$0xf]
        %v702 = vld [vmem:[%s7 + $0x34] sm:$0xf]
        %v703 = vld [vmem:[%s7 + $0x38] sm:$0xf]
        %v704 = vld [vmem:[%s7 + $0x3c] sm:$0xf]
        %v705 = vld [vmem:[%s8] sm:$0x1]
        %v707 = vperm.slane %v705, 0
        %v725 = vunpack.c.l.b16 %v689
        %v726 = vunpack.c.l.b16 %v690
        %v727 = vunpack.c.l.b16 %v691
        %v728 = vunpack.c.l.b16 %v692
        %v729 = vunpack.c.l.b16 %v693
        %v730 = vunpack.c.l.b16 %v694
        %v731 = vunpack.c.l.b16 %v695
        %v732 = vunpack.c.l.b16 %v696
        %v733 = vunpack.c.l.b16 %v697
        %v734 = vunpack.c.l.b16 %v698
        %v735 = vunpack.c.l.b16 %v699
        %v736 = vunpack.c.l.b16 %v700
        %v737 = vunpack.c.l.b16 %v701
        %v738 = vunpack.c.l.b16 %v702
        %v739 = vunpack.c.l.b16 %v703
        %v740 = vunpack.c.l.b16 %v704
        %v741 = vpack.c.b16 %v726, %v725
        %v742 = vpack.c.b16 %v728, %v727
        %v743 = vpack.c.b16 %v730, %v729
        %v744 = vpack.c.b16 %v732, %v731
        %v745 = vpack.c.b16 %v734, %v733
        %v746 = vpack.c.b16 %v736, %v735
        %v747 = vpack.c.b16 %v738, %v737
        %v748 = vpack.c.b16 %v740, %v739
        %757 = vmatpush.bf16.msra.mxu0 %v748
        %758 = vmatpush.bf16.msra.mxu0 %v747
        %759 = vmatpush.bf16.msra.mxu0 %v746
        %760 = vmatpush.bf16.msra.mxu0 %v745
        %761 = vmatpush.bf16.msra.mxu0 %v744
        %762 = vmatpush.bf16.msra.mxu0 %v743
        %763 = vmatpush.bf16.msra.mxu0 %v742
        %764 = vmatpush.bf16.msra.mxu0 %v741
        %765 = vmatmul.bf16.gmra.mxu0 %v688
        %v766 = vpop.f32.mrf.mxu0
        %v767 = vadd.f32 %v707, %v766
        %v768 = vpop.f32.mrf.mxu0
        %v769 = vadd.f32 %v707, %v768
        %770 = vdwg.mxu0
        %vm771 = vcmask 64512
        %772 = vst.msk [vmem:[%s431] sm:$0xff] %vm771, %v767
        %773 = vst.msk [vmem:[%s431 + $0x8] sm:$0xff] %vm771, %v769
        %s774 = smul.u32 2, %s27
        %p775 = scmp.lt.s32.totalorder %s774, 3
        %s776 = scalar_select %p775, %s774, 3
        %s777 = smul.addr %s776, 8
        %s778 = scalar_lea.vmem %s9, %s777
        // Predicated region
        $region73: #{tpu_custom_call.1} parent=55 // pred_check
          %p779 = pneg %p244
        $region74: #{tpu_custom_call.1} parent=55 // pred_check_branch
          %781 = sbr.rel (%p779) target = $region76
        $region75: #{tpu_custom_call.1} parent=55 // pred_region
          %s782 = smul.u32 2, %s27
        $region76: #{tpu_custom_call.1} parent=55 // pred_fallthru
          _
      $region56: #{tpu_custom_call.1} parent=5 // pred_fallthru
        _
      %p783 = scmp.le.s32.totalorder 2, %s22
      // Predicated region
      $region77: #{tpu_custom_call.1} parent=5 // pred_check
        %p784 = pneg %p783
      $region78: #{tpu_custom_call.1} parent=5 // pred_check_branch
        %786 = sbr.rel (%p784) target = $region80
      $region79: #{tpu_custom_call.1} parent=5 // pred_region
        %s787 = ssub.s32 %s22, 2
        // Predicated region
        $region81: #{tpu_custom_call.1} parent=79 // pred_check
          %p788 = pneg %p250
        $region82: #{tpu_custom_call.1} parent=79 // pred_check_branch
          %790 = sbr.rel (%p788) target = $region84
        $region83: #{tpu_custom_call.1} parent=79 // pred_region
          %s791 = smul.u32 2, %s28
          %p792 = scmp.lt.s32.totalorder %s791, 3
          %s793 = scalar_select %p792, %s791, 3
          %s794 = smul.addr %s793, 8
          %s795 = scalar_lea.vmem %s9, %s794
        $region84: #{tpu_custom_call.1} parent=79 // pred_fallthru
          _
      $region80: #{tpu_custom_call.1} parent=5 // pred_fallthru
        _
    $region6: #{tpu_custom_call.1} parent=1 // loop_footer
      %s26 = sadd.s32 1, %s22
    $region7: #{tpu_custom_call.1} parent=1 // loop_footer_branch
      %21 = sbr.rel target = $region3
    $region8: #{tpu_custom_call.1} parent=1 // loop_exit
      _
    %796 = vsyncpa [#allocation3], 1
    %s797 = scalar_lea.sflag [#allocation3], 1
    %798 = vsyncpa %s797, 1
    %799 = vsyncpa [#allocation5], 1
    %s800 = scalar_lea.sflag [#allocation5], 1
    %801 = vsyncpa %s800, 1
    %802 = vsyncpa [#allocation8], 1

</llo_original>
